<compile_context>
chip_gen: v5e
topology: v5e:2x2
jax: 0.10.0
libtpu: 0.0.40
codegen_flags: <defaults>
</compile_context>

<pallas_src>
import functools

import jax
import jax.numpy as jnp
from jax.experimental import pallas as pl
from jax.experimental.pallas import tpu as pltpu

_EPS = 1e-12            # torch.nn.functional.normalize default
_LANE = 128
_TILE_VMEM_BUDGET = 40 * 1024 * 1024  # conservative per-TC budget (v5e/v6e/v7x)


def _round_up(v, m):
    return (v + m - 1) // m * m


def _sublane_multiple(dtype):
    # 8 sublanes of 32-bit; sub-32-bit dtypes pack along sublanes (16 for bf16,
    # 32 for int8/fp8).
    return max(8, 32 // jnp.dtype(dtype).itemsize)


def _tile_vmem_bytes(tm, tn, f, in_bytes, out_bytes):
    # Double-buffered inputs/outputs + row_scale scratch.
    return (2 * tm * f * in_bytes      # x tile
            + 2 * f * tn * in_bytes    # W^T tile
            + 2 * tm * tn * out_bytes  # out tile
            + 2 * tn * 4               # inv ||w_j||
            + tm * 4)                  # row_scale scratch


def _cosine_kernel(x_ref, wt_ref, inv_wn_ref, o_ref, row_scale_ref, *, scale):
    # x_ref:         (TM, F)   batch tile, operand dtype
    # wt_ref:        (F, TN)   pre-transposed weight tile, operand dtype
    # inv_wn_ref:    (1, TN)   precomputed f32 inverse class-row norms
    # o_ref:         (TM, TN)  logits tile
    # row_scale_ref: (TM, 1)   f32 scratch: scale/||x_i||, cached across class tiles
    @pl.when(pl.program_id(1) == 0)
    def _():
        # Full feature dim is resident, so per-row norms are exact. Computed
        # once per batch tile (class axis is inner + "arbitrary"), reused for
        # every class tile from the VMEM scratch. rsqrt goes to the EUP.
        xf = x_ref[...].astype(jnp.float32)
        sumsq = jnp.sum(xf * xf, axis=1, keepdims=True)                       # [TM, 1]
        row_scale_ref[...] = scale * jax.lax.rsqrt(jnp.maximum(sumsq, _EPS * _EPS))

    # Raw matmul in the operand dtype, f32 accumulation on the MXU.
    dot = jnp.dot(x_ref[...], wt_ref[...], preferred_element_type=jnp.float32)  # [TM, TN]

    # Fused epilogue: dot * (scale/||x_i||) * (1/||w_j||), lane-dense store.
    o_ref[...] = (dot * row_scale_ref[...] * inv_wn_ref[...]).astype(o_ref.dtype)


def prepare_cosine_weight(weight, *, compute_dtype=None):
    """ONE-TIME parameter prep (call once per weight update, not per forward).

    Returns (wt, inv_wn):
      wt     : [F, c_pad] pre-transposed, class-padded weight (classes on lanes)
      inv_wn : [1, c_pad] f32 inverse L2 norm per class row (padded cols -> 1.0)
    """
    num_classes, _ = weight.shape
    c_pad = _round_up(num_classes, _LANE)

    w32 = weight.astype(jnp.float32)
    inv_wn = jax.lax.rsqrt(jnp.maximum(jnp.sum(w32 * w32, axis=1), _EPS * _EPS))

    wt = weight.T
    if compute_dtype is not None:
        wt = wt.astype(compute_dtype)  # e.g. bf16 operands: halves weight HBM/VMEM traffic
    if c_pad != num_classes:
        wt = jnp.pad(wt, ((0, 0), (0, c_pad - num_classes)))
        inv_wn = jnp.pad(inv_wn, (0, c_pad - num_classes), constant_values=1.0)
    return wt, inv_wn.reshape(1, c_pad)


def cosine_classifier_fwd(x, wt, inv_wn, *, num_classes, scale=10.0,
                          out_dtype=jnp.float32, tm_max=512):
    """Forward pass. x: [B, F]; wt: [F, c_pad]; inv_wn: [1, c_pad]."""
    B, F = x.shape
    F2, c_pad = wt.shape
    assert F == F2 and c_pad % _LANE == 0 and num_classes <= c_pad

    in_bytes = jnp.dtype(wt.dtype).itemsize
    out_bytes = jnp.dtype(out_dtype).itemsize
    sub = _sublane_multiple(wt.dtype)

    # Batch tile: as large as the budget allows — the weight stream is read
    # once per batch tile, so bigger tm = higher arithmetic intensity.
    tm = min(_round_up(tm_max, sub), _round_up(B, sub))

    def pick_tn(tm_):
        # Largest lane-multiple divisor of c_pad that fits the VMEM budget.
        # tn == c_pad makes W^T fully class-resident (constant j block index).
        for nt in range(1, c_pad // _LANE + 1):
            if c_pad % nt:
                continue
            tn_ = c_pad // nt
            if tn_ % _LANE:
                continue
            if _tile_vmem_bytes(tm_, tn_, F, in_bytes, out_bytes) <= _TILE_VMEM_BUDGET:
                return tn_
        return None

    tn = pick_tn(tm)
    while tn is None and tm > sub:
        tm = max(sub, _round_up(tm // 2, sub))
        tn = pick_tn(tm)
    if tn is None:
        tn = _LANE
    # TODO(synk): for very large in_features, add a K grid axis ("arbitrary",
    # last) with wrapper-precomputed per-row inverse norms; F-resident is fine
    # for typical embedding dims (and mandatory-checked by the budget above).

    b_pad = _round_up(B, tm)
    if b_pad != B:
        x = jnp.pad(x, ((0, b_pad - B), (0, 0)))
    if x.dtype != wt.dtype:
        x = x.astype(wt.dtype)

    vmem_used = _tile_vmem_bytes(tm, tn, F, in_bytes, out_bytes)
    vmem_limit = int(min(max(vmem_used + (2 << 20), 16 << 20), 64 << 20))

    cost = pl.CostEstimate(
        flops=2 * b_pad * c_pad * F,
        transcendentals=b_pad,
        bytes_accessed=(b_pad * F * in_bytes
                        + (b_pad // tm) * F * c_pad * in_bytes
                        + b_pad * c_pad * out_bytes),
    )

    grid = (b_pad // tm, c_pad // tn)

    out = pl.pallas_call(
        functools.partial(_cosine_kernel, scale=float(scale)),
        out_shape=jax.ShapeDtypeStruct((b_pad, c_pad), out_dtype),
        grid_spec=pltpu.PrefetchScalarGridSpec(
            num_scalar_prefetch=0,
            grid=grid,
            in_specs=[
                pl.BlockSpec((tm, F), lambda i, j: (i, 0)),   # x tile
                pl.BlockSpec((F, tn), lambda i, j: (0, j)),   # W^T tile (j const when resident)
                pl.BlockSpec((1, tn), lambda i, j: (0, j)),   # inv ||w_j||
            ],
            out_specs=pl.BlockSpec((tm, tn), lambda i, j: (i, j)),
            scratch_shapes=[pltpu.VMEM((tm, 1), jnp.float32)],  # cached row_scale
        ),
        compiler_params=pltpu.CompilerParams(
            # batch axis parallel (megacore on v7x); class axis arbitrary so the
            # row_scale scratch stays coherent within a batch tile.
            dimension_semantics=("parallel", "arbitrary"),
            vmem_limit_bytes=vmem_limit,
        ),
        cost_estimate=cost,
    )(x, wt, inv_wn)

    # TODO(synk): for very large C, return the padded [b_pad, c_pad] array to a
    # masking consumer to avoid this extra HBM copy.
    return out[:B, :num_classes]


def cosine_classifier(x, weight, scale=10.0, **kwargs):
    """Convenience path. For production, call prepare_cosine_weight() once and
    reuse (wt, inv_wn) across forward calls (avoids per-call weight copies)."""
    wt, inv_wn = prepare_cosine_weight(
        weight, compute_dtype=kwargs.pop("compute_dtype", None))
    return cosine_classifier_fwd(x, wt, inv_wn, num_classes=weight.shape[0],
                                 scale=scale, **kwargs)


def _xavier_uniform(key, shape):
    # nn.init.xavier_uniform_ on weight [num_classes, in_features]:
    # fan_in = in_features, fan_out = num_classes, gain = 1.0
    fan_out, fan_in = shape
    bound = (6.0 / (fan_in + fan_out)) ** 0.5
    return jax.random.uniform(key, shape, jnp.float32, -bound, bound)


if __name__ == "__main__":
    key = jax.random.PRNGKey(0)
    kx, kw = jax.random.split(key)

    batch, in_features, num_classes = 8, 32, 16
    scale = 10.0

    x = jax.random.normal(kx, (batch, in_features), dtype=jnp.float32)
    weight = _xavier_uniform(kw, (num_classes, in_features))

    # One-time parameter prep, hoisted out of the forward path.
    wt, inv_wn = prepare_cosine_weight(weight)
    out = cosine_classifier_fwd(x, wt, inv_wn, num_classes=num_classes, scale=scale)
    out = jax.block_until_ready(out)

    # Reference in plain JAX (same math as the PyTorch module).
    eps = 1e-12
    x_n = x / jnp.maximum(jnp.linalg.norm(x, axis=1, keepdims=True), eps)
    w_n = weight / jnp.maximum(jnp.linalg.norm(weight, axis=1, keepdims=True), eps)
    ref = scale * (x_n @ w_n.T)

    assert out.shape == (batch, num_classes)
    assert jnp.allclose(out, ref, atol=1e-5, rtol=1e-5)

    print("KERNEL_OK")
</pallas_src>

<mosaic_0001>
module attributes {stable_mosaic.version = 11 : i64} {
  func.func @_cosine_kernel(%arg0: i32, %arg1: i32, %arg2: memref<8x32xf32, #tpu.memory_space<vmem>>, %arg3: memref<32x128xf32, #tpu.memory_space<vmem>>, %arg4: memref<1x128xf32, #tpu.memory_space<vmem>>, %arg5: memref<8x128xf32, #tpu.memory_space<vmem>>, %arg6: memref<8x1xf32, #tpu.memory_space<vmem>>) attributes {dimension_semantics = [#tpu.dimension_semantics<parallel>, #tpu.dimension_semantics<arbitrary>], iteration_bounds = array<i64: 1, 1>, scalar_prefetch = 0 : i64, scratch_operands = 1 : i64, tpu.core_type = #tpu.core_type<tc>, window_params = [{transform_indices = @transform_0, window_bounds = array<i64: 8, 32>}, {transform_indices = @transform_1, window_bounds = array<i64: 32, 128>}, {transform_indices = @transform_2, window_bounds = array<i64: 1, 128>}, {transform_indices = @transform_3, window_bounds = array<i64: 8, 128>}]} {
    %c0_i32 = arith.constant 0 : i32
    %0 = arith.cmpi eq, %arg1, %c0_i32 : i32
    %1 = arith.extui %0 : i1 to i32
    %c0_i32_0 = arith.constant 0 : i32
    %2 = arith.cmpi ne, %1, %c0_i32_0 : i32
    scf.if %2 {
      %c0_10 = arith.constant 0 : index
      %c0_11 = arith.constant 0 : index
      %13 = vector.load %arg2[%c0_10, %c0_11] : memref<8x32xf32, #tpu.memory_space<vmem>>, vector<8x32xf32>
      %14 = arith.mulf %13, %13 : vector<8x32xf32>
      %cst_12 = arith.constant dense<0.000000e+00> : vector<8xf32>
      %15 = vector.multi_reduction <add>, %14, %cst_12 [1] : vector<8x32xf32> to vector<8xf32>
      %16 = vector.shape_cast %15 : vector<8xf32> to vector<8x1xf32>
      %cst_13 = arith.constant 1.000000e-24 : f32
      %17 = vector.broadcast %cst_13 : f32 to vector<8x1xf32>
      %18 = arith.maximumf %16, %17 : vector<8x1xf32>
      %19 = math.rsqrt %18 : vector<8x1xf32>
      %cst_14 = arith.constant 1.000000e+01 : f32
      %20 = vector.broadcast %cst_14 : f32 to vector<8x1xf32>
      %21 = arith.mulf %20, %19 : vector<8x1xf32>
      %c0_15 = arith.constant 0 : index
      %c0_16 = arith.constant 0 : index
      %22 = vector.load %arg6[%c0_15, %c0_16] : memref<8x1xf32, #tpu.memory_space<vmem>>, vector<8x1xf32>
      tpu.vector_store %arg6[%c0_15, %c0_16], %21 {strides = array<i32>} : memref<8x1xf32, #tpu.memory_space<vmem>>, vector<8x1xf32>,
    } else {
    }
    %c0 = arith.constant 0 : index
    %c0_1 = arith.constant 0 : index
    %3 = vector.load %arg2[%c0, %c0_1] : memref<8x32xf32, #tpu.memory_space<vmem>>, vector<8x32xf32>
    %c0_2 = arith.constant 0 : index
    %c0_3 = arith.constant 0 : index
    %4 = vector.load %arg3[%c0_2, %c0_3] : memref<32x128xf32, #tpu.memory_space<vmem>>, vector<32x128xf32>
    %cst = arith.constant dense<0.000000e+00> : vector<8x128xf32>
    %5 = tpu.matmul %3, %4, %cst {dimension_numbers = #tpu.dot_dimension_numbers<[1], [0], [0], [1], [0, 0, 1, 1], [], []>} : vector<8x32xf32>, vector<32x128xf32>, vector<8x128xf32> -> vector<8x128xf32>
    %c0_4 = arith.constant 0 : index
    %c0_5 = arith.constant 0 : index
    %6 = vector.load %arg6[%c0_4, %c0_5] : memref<8x1xf32, #tpu.memory_space<vmem>>, vector<8x1xf32>
    %7 = vector.broadcast %6 : vector<8x1xf32> to vector<8x128xf32>
    %8 = arith.mulf %5, %7 : vector<8x128xf32>
    %c0_6 = arith.constant 0 : index
    %c0_7 = arith.constant 0 : index
    %9 = vector.load %arg4[%c0_6, %c0_7] : memref<1x128xf32, #tpu.memory_space<vmem>>, vector<1x128xf32>
    %10 = vector.broadcast %9 : vector<1x128xf32> to vector<8x128xf32>
    %11 = arith.mulf %8, %10 : vector<8x128xf32>
    %c0_8 = arith.constant 0 : index
    %c0_9 = arith.constant 0 : index
    %12 = vector.load %arg5[%c0_8, %c0_9] : memref<8x128xf32, #tpu.memory_space<vmem>>, vector<8x128xf32>
    tpu.vector_store %arg5[%c0_8, %c0_9], %11 {strides = array<i32>} : memref<8x128xf32, #tpu.memory_space<vmem>>, vector<8x128xf32>,
    return
  }
  func.func @transform_0(%arg0: i32, %arg1: i32) -> (i32, i32) {
    %c0_i32 = arith.constant 0 : i32
    %c0_i32_0 = arith.constant 0 : i32
    return %arg0, %c0_i32 : i32, i32
  }
  func.func @transform_1(%arg0: i32, %arg1: i32) -> (i32, i32) {
    %c0_i32 = arith.constant 0 : i32
    %c0_i32_0 = arith.constant 0 : i32
    return %c0_i32, %arg1 : i32, i32
  }
  func.func @transform_2(%arg0: i32, %arg1: i32) -> (i32, i32) {
    %c0_i32 = arith.constant 0 : i32
    %c0_i32_0 = arith.constant 0 : i32
    return %c0_i32, %arg1 : i32, i32
  }
  func.func @transform_3(%arg0: i32, %arg1: i32) -> (i32, i32) {
    %c0_i32 = arith.constant 0 : i32
    return %arg0, %arg1 : i32, i32
  }
}

</mosaic_0001>

<llo_original>
// kernel: tpu_custom_call.1
$region0: #{tpu_custom_call.1}
  #allocation0 [shape = 'u32[]', space=smem, size = 0x4, offset = 0x4, fixed_abs, tag = 'smem constant byte address 0x4 - core index']
  #allocation1 [shape = 'u32[72,128]{1,0:T(1,128)}', space=vmem, size = 0x9000, scoped, tag = 'internal scratch']
  #allocation2 [shape = 'f32[8,1]{1,0:T(8,128)}', space=vmem, size = 0x1000, scoped, tag = 'scratch operand']
  %s0 = inlined_call_operand.hbm [shape: f32[8,32], index: 0, kind: input, shape index: {}]
  %s1 = inlined_call_operand.hbm [shape: f32[32,128], index: 1, kind: input, shape index: {}]
  %s2 = inlined_call_operand.vmem [shape: f32[1,128], index: 2, kind: input, shape index: {}]
  %s3 = inlined_call_operand.hbm [shape: f32[8,128], index: 3, kind: output, shape index: {}]
  %s4 = sld [smem:[#allocation0]]
  $region34: #{tpu_custom_call.1} parent=0
    _
  %s6 = ssub.s32 1, %s4
  %s7 = scalar_select 0, %s6, %s4
  $region1: #{tpu_custom_call.1} parent=0
    #allocation3 [shape = 'u8[4096]{0}', space=vmem, size = 0x1000, scoped, tag = 'input window, operand 0, single buffered']
    #allocation4 [shape = 's32[1]{0}', space=sflag, size = 0x4, scoped, tag = 'scoped memory for tpu_custom_call.1']
    #allocation5 [shape = 's32[1]{0}', space=sflag, size = 0x4, scoped, tag = 'scoped memory for tpu_custom_call.1']
    #allocation6 [shape = 'u8[16384]{0}', space=vmem, size = 0x4000, scoped, tag = 'input window, operand 1, single buffered']
    #allocation7 [shape = 's32[1]{0}', space=sflag, size = 0x4, scoped, tag = 'scoped memory for tpu_custom_call.1']
    #allocation8 [shape = 'u8[4096]{0}', space=vmem, size = 0x1000, scoped, tag = 'output window, operand 0, single buffered']
    %8 = vsyncpa [#allocation4], 0
    %9 = vsyncpa [#allocation7], 0
    %10 = vsyncpa [#allocation5], 0
    // Predicated region
    $region2: #{tpu_custom_call.1} parent=1 // pred_check
      _
    $region3: #{tpu_custom_call.1} parent=1 // pred_check_branch
      %12 = sbr.rel (0) target = $region5
    $region4: #{tpu_custom_call.1} parent=1 // pred_region
      %14 = vsyncadd [#allocation4], 0
      %s16 = sshll.u32 %s0, 4
      %s17 = int_to_ptr.hbm [resolvable:$true] %s16
      %s18 = sshll.u32 [#allocation3], 4
      %s19 = int_to_ptr.vmem [resolvable:$true] %s18
      %21 = dma.hbm_to_vmem [thread:$0]  %s17, 128, %s19, [#allocation4]
    $region5: #{tpu_custom_call.1} parent=1 // pred_fallthru
      _
    // Predicated region
    $region6: #{tpu_custom_call.1} parent=1 // pred_check
      _
    $region7: #{tpu_custom_call.1} parent=1 // pred_check_branch
      %23 = sbr.rel (0) target = $region9
    $region8: #{tpu_custom_call.1} parent=1 // pred_region
      %25 = vsyncadd [#allocation7], 0
      %s26 = sshll.u32 %s1, 4
      %s27 = int_to_ptr.hbm [resolvable:$true] %s26
      %s28 = sshll.u32 [#allocation6], 4
      %s29 = int_to_ptr.vmem [resolvable:$true] %s28
      %34 = dma.hbm_to_vmem [thread:$0]  %s27, 512, %s29, [#allocation7], 128, 128, 8
    $region9: #{tpu_custom_call.1} parent=1 // pred_fallthru
      _
    // Predicated region
    $region10: #{tpu_custom_call.1} parent=1 // pred_check
      _
    $region11: #{tpu_custom_call.1} parent=1 // pred_check_branch
      %36 = sbr.rel (0) target = $region13
    $region12: #{tpu_custom_call.1} parent=1 // pred_region
      _
    $region13: #{tpu_custom_call.1} parent=1 // pred_fallthru
      _
    // Predicated region
    $region14: #{tpu_custom_call.1} parent=1 // pred_check
      _
    $region15: #{tpu_custom_call.1} parent=1 // pred_check_branch
      %38 = sbr.rel (0) target = $region17
    $region16: #{tpu_custom_call.1} parent=1 // pred_region
      %40 = dma.done [#allocation4], 128
    $region17: #{tpu_custom_call.1} parent=1 // pred_fallthru
      _
    // Predicated region
    $region18: #{tpu_custom_call.1} parent=1 // pred_check
      _
    $region19: #{tpu_custom_call.1} parent=1 // pred_check_branch
      %42 = sbr.rel (0) target = $region21
    $region20: #{tpu_custom_call.1} parent=1 // pred_region
      %44 = dma.done [#allocation7], 512
    $region21: #{tpu_custom_call.1} parent=1 // pred_fallthru
      _
    %p45 = scmp.eq.s32.totalorder 0, 0
    // Predicated region
    $region22: #{tpu_custom_call.1} parent=1 // pred_check
      %p46 = pneg %p45
    $region23: #{tpu_custom_call.1} parent=1 // pred_check_branch
      %48 = sbr.rel (%p46) target = $region25
    $region24: #{tpu_custom_call.1} parent=1 // pred_region
      %v49 = vld [vmem:[#allocation3] sm:$0xff]
      %v50 = vmul.f32 %v49, %v49
      %vm51 = vcmask 261120
      %v52 = vsel %vm51, %v50, 0.0
      %53 = vadd.xlane.f32.xlu0 %v52
      %v54 = vpop.xlane.xlu0 %53
      %v55 = vmax.f32 %v54, 1e-24
      %v56 = vrsqrt.pop %v55
      %v57 = vmul.f32 %v56, %v55
      %v58 = vmul.f32 %v57, %v56
      %v59 = vmul.f32 0.5, %v58
      %v60 = vsub.f32 1.5, %v59
      %v61 = vmul.f32 %v56, %v60
      %vm62 = vweird.f32 %v55
      %vm63 = vweird.f32 %v56
      %vm64 = vmor %vm62, %vm63
      %v65 = vsel %vm64, %v56, %v61
      %v66 = vmul.f32 %v65, 10.0
      %vm67 = vcmask 7168
      %68 = vst.msk [vmem:[#allocation2] sm:$0xff] %vm67, %v66
    $region25: #{tpu_custom_call.1} parent=1 // pred_fallthru
      _
    %v69 = vld [vmem:[#allocation3] sm:$0xff]
    %v70 = vld [vmem:[#allocation6] sm:$0xff]
    %v71 = vld [vmem:[#allocation6 + $0x8] sm:$0xff]
    %v72 = vld [vmem:[#allocation6 + $0x10] sm:$0xff]
    %v73 = vld [vmem:[#allocation6 + $0x18] sm:$0xff]
    %vm74 = vcmask 261120
    %v76 = vsel %vm74, %v69, 0
    %78 = vmatpush.msra.mxu0 0.0
    %79 = vmatpush.msra.mxu0 0.0
    %80 = vmatpush.msra.mxu0 0.0
    %81 = vmatpush.msra.mxu0 0.0
    %82 = vmatpush.msra.mxu0 0.0
    %83 = vmatpush.msra.mxu0 0.0
    %84 = vmatpush.msra.mxu0 0.0
    %85 = vmatpush.msra.mxu0 0.0
    %86 = vmatpush.msra.mxu0 0.0
    %87 = vmatpush.msra.mxu0 0.0
    %88 = vmatpush.msra.mxu0 0.0
    %89 = vmatpush.msra.mxu0 0.0
    %90 = vmatpush.msra.mxu0 %v73
    %91 = vmatpush.msra.mxu0 %v72
    %92 = vmatpush.msra.mxu0 %v71
    %93 = vmatpush.msra.mxu0 %v70
    %94 = vmatmul.f32.gmra.mxu0 %v76
    %v95 = vpop.f32.mrf.mxu0
    %v96 = vadd.f32 0.0, %v95
    %97 = vdwg.mxu0
    %v98 = vld [vmem:[#allocation2] sm:$0xff]
    %100 = vset.pattern.permute.xlu0 0
    %101 = vperm.xlu0 %100, %v98
    %v102 = vpop.permute.xlu0 %101
    %v104 = vmul.f32 %v96, %v102
    %v105 = vld [vmem:[%s2] sm:$0x1]
    %v107 = vperm.slane %v105, 0
    %v109 = vmul.f32 %v104, %v107
    %110 = vst [vmem:[#allocation8] sm:$0xff] %v109
    // Predicated region
    $region26: #{tpu_custom_call.1} parent=1 // pred_check
      _
    $region27: #{tpu_custom_call.1} parent=1 // pred_check_branch
      %112 = sbr.rel (0) target = $region29
    $region28: #{tpu_custom_call.1} parent=1 // pred_region
      %114 = vsyncadd [#allocation5], 0
      %s116 = sshll.u32 [#allocation8], 4
      %s117 = int_to_ptr.vmem [resolvable:$true] %s116
      %s118 = sshll.u32 %s3, 4
      %s119 = int_to_ptr.hbm [resolvable:$true] %s118
      %121 = dma.vmem_to_hbm [thread:$0]  %s117, 128, %s119, [#allocation5]
    $region29: #{tpu_custom_call.1} parent=1 // pred_fallthru
      _
    // Predicated region
    $region30: #{tpu_custom_call.1} parent=1 // pred_check
      _
    $region31: #{tpu_custom_call.1} parent=1 // pred_check_branch
      %123 = sbr.rel (0) target = $region33
    $region32: #{tpu_custom_call.1} parent=1 // pred_region
      %125 = dma.done [#allocation5], 128
    $region33: #{tpu_custom_call.1} parent=1 // pred_fallthru
      _
    %126 = vsyncpa [#allocation4], 1
    %127 = vsyncpa [#allocation7], 1
    %128 = vsyncpa [#allocation5], 1

</llo_original>
